<compile_context>
chip_gen: v5e
topology: v5e:2x2
jax: 0.10.0
libtpu: 0.0.40
codegen_flags: <defaults>
</compile_context>

<pallas_src>
import functools

import jax
import jax.numpy as jnp
from jax.experimental import pallas as pl
from jax.experimental.pallas import tpu as pltpu


def _round_up(x, m):
    return ((x + m - 1) // m) * m


def _qgnn_mixer_kernel(q_ref, w1_ref, w2_ref, b2_ref, w3_ref, b3_ref,
                       w4_ref, b4_ref, out_ref, *, matmul_dtype):
    """One lane-dense tile (batch rows on the 128-lane axis) of the mixer.

    All heavy math is MXU matmuls with ~128-shaped M/K dims; per-agent psi is
    a block matmul with biases folded, the agent mean is folded into the tiled
    phi-L1 weight.  Only ReLUs, two lane-broadcast bias adds and the operand
    casts run on the VPU.  Weights arrive pre-|abs|'d / pre-cast / pre-folded.
    """
    q = q_ref[...]                                      # (K1, tN) matmul_dtype

    # psi layer 1 (bias folded via ones row in q): (A*H, K1) @ (K1, tN)
    h1 = jnp.dot(w1_ref[...], q, preferred_element_type=jnp.float32)
    h1 = jnp.maximum(h1, 0.0)                           # (A*H, tN) f32

    # psi layer 2, block-diagonal over agents: (A*E, A*H) @ (A*H, tN)
    h2 = jnp.dot(w2_ref[...], h1.astype(matmul_dtype),
                 preferred_element_type=jnp.float32) + b2_ref[...]
    h2 = jnp.maximum(h2, 0.0)                           # per-agent ReLU (A*E, tN)

    # phi layer 1 with agent-mean folded into the lane-tiled weight:
    # (H, A*E) @ (A*E, tN)  ==  |W3| @ mean_a(relu(h2_a))
    g1 = jnp.dot(w3_ref[...], h2.astype(matmul_dtype),
                 preferred_element_type=jnp.float32) + b3_ref[...]
    g1 = jnp.maximum(g1, 0.0)                           # (H, tN)

    # phi layer 2: (1, H) @ (H, tN) -> lane-dense output row
    out = jnp.dot(w4_ref[...], g1.astype(matmul_dtype),
                  preferred_element_type=jnp.float32) + b4_ref[...]
    out_ref[...] = out                                  # (1, tN) unmasked store


@functools.partial(jax.jit, static_argnames=("tile_n", "use_bf16_matmul"))
def qgnn_mixer_forward(q_values, states, params, *,
                       tile_n=8192, use_bf16_matmul=True):
    """q_values: (B, T, n_agents) f32; states unused (use_hypernet=False).

    tile_n: rows (B*T entries) per grid step, rounded to a multiple of 128 and
            clamped so the parallel grid has >=2 steps when N allows (v7x TCs).
    use_bf16_matmul: bf16 MXU operands with f32 accumulation (default; halves
            vmatmul pushes and weight/input DMA).  f32 path for validation.
    """
    del states
    B, T, A = q_values.shape
    N = B * T

    w1, b1, w2, b2, w3, b3, w4, b4 = params             # stored as (out, in)
    H = w1.shape[0]
    E = w2.shape[0]

    matmul_dtype = jnp.bfloat16 if use_bf16_matmul else jnp.float32

    # ---- tile / grid (lane-dense along N, padded to a tile multiple) -------
    n_pad128 = _round_up(N, 128)
    want = max(128, (int(tile_n) // 128) * 128)
    half = ((n_pad128 // 2) // 128) * 128               # >=2 steps -> both v7x TCs
    if half >= 128:
        want = min(want, half)
    tile = max(128, min(want, n_pad128))
    n_pad = _round_up(N, tile)

    # ---- fold weights once in the wrapper (abs / bias-fold / mean-fold / cast)
    eye = jnp.eye(A, dtype=jnp.float32)
    K1 = _round_up(A + 1, 8)                            # pad K of psi-L1 to sublane mult
    w1_aug = jnp.concatenate(
        [jnp.kron(eye, jnp.abs(w1)),                    # (A*H, A) per-agent |w1|
         jnp.tile(b1, (A, 1)),                          # bias column (ones row in q)
         jnp.zeros((A * H, K1 - (A + 1)), jnp.float32)],
        axis=1)                                         # (A*H, K1)
    w2_bd = jnp.kron(eye, jnp.abs(w2))                  # (A*E, A*H) block-diagonal
    b2_st = jnp.tile(b2, (A, 1))                        # (A*E, 1)
    w3_tl = jnp.tile(jnp.abs(w3) * (1.0 / A), (1, A))   # (H, A*E), agent mean folded
    w4_ab = jnp.abs(w4)                                 # (1, H)

    w1_aug = w1_aug.astype(matmul_dtype)
    w2_bd = w2_bd.astype(matmul_dtype)
    w3_tl = w3_tl.astype(matmul_dtype)
    w4_ab = w4_ab.astype(matmul_dtype)
    b2_st = b2_st.astype(jnp.float32)
    b3_f = b3.astype(jnp.float32)
    b4_f = b4.astype(jnp.float32)

    # ---- q slab: (K1, n_pad) with ones row (bias) and zero pad rows --------
    # Everything below is inside this jit, so XLA fuses reshape + pad +
    # concat + transpose + cast into a single layout pass over the input.
    q_flat = q_values.reshape(N, A).astype(jnp.float32)
    if n_pad != N:
        q_flat = jnp.pad(q_flat, ((0, n_pad - N), (0, 0)))
    ones_row = jnp.ones((n_pad, 1), jnp.float32)
    pad_rows = jnp.zeros((n_pad, K1 - (A + 1)), jnp.float32)
    q_aug = jnp.concatenate([q_flat, ones_row, pad_rows], axis=1).T
    q_aug = q_aug.astype(matmul_dtype)                  # (K1, n_pad), N on lanes

    def pinned(shape):
        # Full-array block, constant index map -> stays VMEM-resident.
        return pl.BlockSpec(shape, lambda i: (0, 0))

    out = pl.pallas_call(
        functools.partial(_qgnn_mixer_kernel, matmul_dtype=matmul_dtype),
        out_shape=jax.ShapeDtypeStruct((1, n_pad), jnp.float32),
        grid=(n_pad // tile,),
        in_specs=[
            pl.BlockSpec((K1, tile), lambda i: (0, i)),   # q slab tile
            pinned((A * H, K1)),                          # psi L1 (bias folded)
            pinned((A * E, A * H)), pinned((A * E, 1)),   # psi L2 block-diag + bias
            pinned((H, A * E)), pinned((H, 1)),           # phi L1 (mean folded) + bias
            pinned((1, H)), pinned((1, 1)),               # phi L2 + bias
        ],
        out_specs=pl.BlockSpec((1, tile), lambda i: (0, i)),
        compiler_params=pltpu.CompilerParams(
            dimension_semantics=("parallel",),            # v7x: grid splits over 2 TCs
            vmem_limit_bytes=48 * 1024 * 1024),
    )(q_aug, w1_aug, w2_bd, b2_st, w3_tl, b3_f, w4_ab, b4_f)

    return out[0, :N].reshape(B, T, 1)


def _reference_forward(q_values, params):
    """Pure-JAX reference of the same deep-set mixer (weights are (out, in))."""
    w1, b1, w2, b2, w3, b3, w4, b4 = params
    B, T, A = q_values.shape
    x = q_values.reshape(B * T, A, 1).astype(jnp.float32)
    h1 = jax.nn.relu(x @ jnp.abs(w1).T + b1.T)          # (N, A, H)
    h2 = jax.nn.relu(h1 @ jnp.abs(w2).T + b2.T)         # (N, A, E)
    agg = h2.mean(axis=1)                               # (N, E)
    # TODO(synk): AggMixer uses GenAgg (learned generalized aggregation); its
    # parametrization is not in the provided source, so the permutation-
    # invariant mean aggregator of the plain Mixer is used here.
    g1 = jax.nn.relu(agg @ jnp.abs(w3).T + b3.T)        # (N, H)
    out = g1 @ jnp.abs(w4).T + b4.T                     # (N, 1)
    return out.reshape(B, T, 1)


def init_params(key, embed_dim, midmult=1.0):
    """Deterministic init.  Weights stored pre-transposed as (out, in)."""
    H = int(round(embed_dim * midmult))   # middle width from mixer_midmult
    E = embed_dim
    keys = jax.random.split(key, 8)
    sc = 0.1
    w1 = sc * jax.random.normal(keys[0], (H, 1), jnp.float32)   # psi L1 weight
    b1 = sc * jax.random.normal(keys[1], (H, 1), jnp.float32)   # psi L1 bias
    w2 = sc * jax.random.normal(keys[2], (E, H), jnp.float32)   # psi L2 weight
    b2 = sc * jax.random.normal(keys[3], (E, 1), jnp.float32)   # psi L2 bias
    w3 = sc * jax.random.normal(keys[4], (H, E), jnp.float32)   # phi L1 weight
    b3 = sc * jax.random.normal(keys[5], (H, 1), jnp.float32)   # phi L1 bias
    w4 = sc * jax.random.normal(keys[6], (1, H), jnp.float32)   # phi L2 weight
    b4 = sc * jax.random.normal(keys[7], (1, 1), jnp.float32)   # phi L2 bias
    return (w1, b1, w2, b2, w3, b3, w4, b4)


if __name__ == "__main__":
    # Small config consistent with the module:
    #   n_agents=4, mixer_embed_dim=32, psi/phi layers = 2, midmult=1.0,
    #   use_hypernet=False (default), batchnorm=False (default).
    B, T, A = 2, 8, 4
    embed_dim = 32
    state_dim = 16  # per-agent state dim; states unused without hypernet

    key = jax.random.PRNGKey(0)
    kq, ks, kp = jax.random.split(key, 3)
    q_values = jax.random.normal(kq, (B, T, A), jnp.float32)
    states = jax.random.normal(ks, (B, T, A * state_dim), jnp.float32)
    params = init_params(kp, embed_dim, midmult=1.0)

    ref = _reference_forward(q_values, params)

    # f32 path: tight check of the restructured block-matmul dataflow.
    out_f32 = qgnn_mixer_forward(q_values, states, params, use_bf16_matmul=False)
    out_f32 = jax.block_until_ready(out_f32)
    assert out_f32.shape == (B, T, 1)
    assert jnp.allclose(out_f32, ref, atol=1e-4, rtol=1e-4), "f32 mismatch vs reference"

    # Default path: bf16 MXU operands (f32 accumulation) — looser tolerance.
    out_bf16 = qgnn_mixer_forward(q_values, states, params)
    out_bf16 = jax.block_until_ready(out_bf16)
    assert out_bf16.shape == (B, T, 1)
    assert jnp.allclose(out_bf16, ref, atol=5e-2, rtol=5e-2), "bf16 mismatch vs reference"

    print("KERNEL_OK")
</pallas_src>

<mosaic_0001>
module attributes {stable_mosaic.version = 11 : i64} {
  func.func @_qgnn_mixer_kernel(%arg0: i32, %arg1: memref<8x128xf32, #tpu.memory_space<vmem>>, %arg2: memref<128x8xf32, #tpu.memory_space<vmem>>, %arg3: memref<128x128xf32, #tpu.memory_space<vmem>>, %arg4: memref<128x1xf32, #tpu.memory_space<vmem>>, %arg5: memref<32x128xf32, #tpu.memory_space<vmem>>, %arg6: memref<32x1xf32, #tpu.memory_space<vmem>>, %arg7: memref<1x32xf32, #tpu.memory_space<vmem>>, %arg8: memref<1x1xf32, #tpu.memory_space<vmem>>, %arg9: memref<1x128xf32, #tpu.memory_space<vmem>>) attributes {dimension_semantics = [#tpu.dimension_semantics<parallel>], iteration_bounds = array<i64: 1>, scalar_prefetch = 0 : i64, scratch_operands = 0 : i64, tpu.core_type = #tpu.core_type<tc>, window_params = [{transform_indices = @transform_0, window_bounds = array<i64: 8, 128>}, {pipeline_mode = #tpu.pipeline_mode<synchronous>, transform_indices = @transform_1, window_bounds = array<i64: 128, 8>}, {pipeline_mode = #tpu.pipeline_mode<synchronous>, transform_indices = @transform_2, window_bounds = array<i64: 128, 128>}, {pipeline_mode = #tpu.pipeline_mode<synchronous>, transform_indices = @transform_3, window_bounds = array<i64: 128, 1>}, {pipeline_mode = #tpu.pipeline_mode<synchronous>, transform_indices = @transform_4, window_bounds = array<i64: 32, 128>}, {pipeline_mode = #tpu.pipeline_mode<synchronous>, transform_indices = @transform_5, window_bounds = array<i64: 32, 1>}, {pipeline_mode = #tpu.pipeline_mode<synchronous>, transform_indices = @transform_6, window_bounds = array<i64: 1, 32>}, {pipeline_mode = #tpu.pipeline_mode<synchronous>, transform_indices = @transform_7, window_bounds = array<i64: 1, 1>}, {transform_indices = @transform_8, window_bounds = array<i64: 1, 128>}]} {
    %c0 = arith.constant 0 : index
    %c0_0 = arith.constant 0 : index
    %0 = vector.load %arg1[%c0, %c0_0] : memref<8x128xf32, #tpu.memory_space<vmem>>, vector<8x128xf32>
    %c0_1 = arith.constant 0 : index
    %c0_2 = arith.constant 0 : index
    %1 = vector.load %arg2[%c0_1, %c0_2] : memref<128x8xf32, #tpu.memory_space<vmem>>, vector<128x8xf32>
    %cst = arith.constant dense<0.000000e+00> : vector<128x128xf32>
    %2 = tpu.matmul %1, %0, %cst {dimension_numbers = #tpu.dot_dimension_numbers<[1], [0], [0], [1], [0, 0, 1, 1], [], []>} : vector<128x8xf32>, vector<8x128xf32>, vector<128x128xf32> -> vector<128x128xf32>
    %cst_3 = arith.constant 0.000000e+00 : f32
    %3 = vector.broadcast %cst_3 : f32 to vector<128x128xf32>
    %4 = arith.maximumf %2, %3 : vector<128x128xf32>
    %c0_4 = arith.constant 0 : index
    %c0_5 = arith.constant 0 : index
    %5 = vector.load %arg3[%c0_4, %c0_5] : memref<128x128xf32, #tpu.memory_space<vmem>>, vector<128x128xf32>
    %cst_6 = arith.constant dense<0.000000e+00> : vector<128x128xf32>
    %6 = tpu.matmul %5, %4, %cst_6 {dimension_numbers = #tpu.dot_dimension_numbers<[1], [0], [0], [1], [0, 0, 1, 1], [], []>} : vector<128x128xf32>, vector<128x128xf32>, vector<128x128xf32> -> vector<128x128xf32>
    %c0_7 = arith.constant 0 : index
    %c0_8 = arith.constant 0 : index
    %7 = vector.load %arg4[%c0_7, %c0_8] : memref<128x1xf32, #tpu.memory_space<vmem>>, vector<128x1xf32>
    %8 = vector.broadcast %7 : vector<128x1xf32> to vector<128x128xf32>
    %9 = arith.addf %6, %8 : vector<128x128xf32>
    %cst_9 = arith.constant 0.000000e+00 : f32
    %10 = vector.broadcast %cst_9 : f32 to vector<128x128xf32>
    %11 = arith.maximumf %9, %10 : vector<128x128xf32>
    %c0_10 = arith.constant 0 : index
    %c0_11 = arith.constant 0 : index
    %12 = vector.load %arg5[%c0_10, %c0_11] : memref<32x128xf32, #tpu.memory_space<vmem>>, vector<32x128xf32>
    %cst_12 = arith.constant dense<0.000000e+00> : vector<32x128xf32>
    %13 = tpu.matmul %12, %11, %cst_12 {dimension_numbers = #tpu.dot_dimension_numbers<[1], [0], [0], [1], [0, 0, 1, 1], [], []>} : vector<32x128xf32>, vector<128x128xf32>, vector<32x128xf32> -> vector<32x128xf32>
    %c0_13 = arith.constant 0 : index
    %c0_14 = arith.constant 0 : index
    %14 = vector.load %arg6[%c0_13, %c0_14] : memref<32x1xf32, #tpu.memory_space<vmem>>, vector<32x1xf32>
    %15 = vector.broadcast %14 : vector<32x1xf32> to vector<32x128xf32>
    %16 = arith.addf %13, %15 : vector<32x128xf32>
    %cst_15 = arith.constant 0.000000e+00 : f32
    %17 = vector.broadcast %cst_15 : f32 to vector<32x128xf32>
    %18 = arith.maximumf %16, %17 : vector<32x128xf32>
    %c0_16 = arith.constant 0 : index
    %c0_17 = arith.constant 0 : index
    %19 = vector.load %arg7[%c0_16, %c0_17] : memref<1x32xf32, #tpu.memory_space<vmem>>, vector<1x32xf32>
    %cst_18 = arith.constant dense<0.000000e+00> : vector<1x128xf32>
    %20 = tpu.matmul %19, %18, %cst_18 {dimension_numbers = #tpu.dot_dimension_numbers<[1], [0], [0], [1], [0, 0, 1, 1], [], []>} : vector<1x32xf32>, vector<32x128xf32>, vector<1x128xf32> -> vector<1x128xf32>
    %c0_19 = arith.constant 0 : index
    %c0_20 = arith.constant 0 : index
    %21 = vector.load %arg8[%c0_19, %c0_20] : memref<1x1xf32, #tpu.memory_space<vmem>>, vector<1x1xf32>
    %22 = vector.broadcast %21 : vector<1x1xf32> to vector<1x128xf32>
    %23 = arith.addf %20, %22 : vector<1x128xf32>
    %c0_21 = arith.constant 0 : index
    %c0_22 = arith.constant 0 : index
    %24 = vector.load %arg9[%c0_21, %c0_22] : memref<1x128xf32, #tpu.memory_space<vmem>>, vector<1x128xf32>
    tpu.vector_store %arg9[%c0_21, %c0_22], %23 {strides = array<i32>} : memref<1x128xf32, #tpu.memory_space<vmem>>, vector<1x128xf32>,
    return
  }
  func.func @transform_0(%arg0: i32) -> (i32, i32) {
    %c0_i32 = arith.constant 0 : i32
    %c0_i32_0 = arith.constant 0 : i32
    return %c0_i32, %arg0 : i32, i32
  }
  func.func @transform_1(%arg0: i32) -> (i32, i32) {
    %c0_i32 = arith.constant 0 : i32
    %c0_i32_0 = arith.constant 0 : i32
    %c0_i32_1 = arith.constant 0 : i32
    return %c0_i32, %c0_i32_0 : i32, i32
  }
  func.func @transform_2(%arg0: i32) -> (i32, i32) {
    %c0_i32 = arith.constant 0 : i32
    %c0_i32_0 = arith.constant 0 : i32
    %c0_i32_1 = arith.constant 0 : i32
    return %c0_i32, %c0_i32_0 : i32, i32
  }
  func.func @transform_3(%arg0: i32) -> (i32, i32) {
    %c0_i32 = arith.constant 0 : i32
    %c0_i32_0 = arith.constant 0 : i32
    %c0_i32_1 = arith.constant 0 : i32
    return %c0_i32, %c0_i32_0 : i32, i32
  }
  func.func @transform_4(%arg0: i32) -> (i32, i32) {
    %c0_i32 = arith.constant 0 : i32
    %c0_i32_0 = arith.constant 0 : i32
    %c0_i32_1 = arith.constant 0 : i32
    return %c0_i32, %c0_i32_0 : i32, i32
  }
  func.func @transform_5(%arg0: i32) -> (i32, i32) {
    %c0_i32 = arith.constant 0 : i32
    %c0_i32_0 = arith.constant 0 : i32
    %c0_i32_1 = arith.constant 0 : i32
    return %c0_i32, %c0_i32_0 : i32, i32
  }
  func.func @transform_6(%arg0: i32) -> (i32, i32) {
    %c0_i32 = arith.constant 0 : i32
    %c0_i32_0 = arith.constant 0 : i32
    %c0_i32_1 = arith.constant 0 : i32
    return %c0_i32, %c0_i32_0 : i32, i32
  }
  func.func @transform_7(%arg0: i32) -> (i32, i32) {
    %c0_i32 = arith.constant 0 : i32
    %c0_i32_0 = arith.constant 0 : i32
    %c0_i32_1 = arith.constant 0 : i32
    return %c0_i32, %c0_i32_0 : i32, i32
  }
  func.func @transform_8(%arg0: i32) -> (i32, i32) {
    %c0_i32 = arith.constant 0 : i32
    %c0_i32_0 = arith.constant 0 : i32
    return %c0_i32, %arg0 : i32, i32
  }
}

</mosaic_0001>

<llo_original>
// kernel: tile.29
$region0: #{tile.29}
  %s0 = inlined_call_operand.vmem [shape: f32[32,4,32], index: 0, kind: input, shape index: {}]
  %s1 = inlined_call_operand.vmem [shape: f32[32,128], index: 1, kind: output, shape index: {}]
  $region1: #{tile.29} parent=0
    #allocation0 [shape = 'u8[131072]{0}', space=vmem, size = 0x20000, scoped, tag = 'scoped mem for input reshape']
    %s3 = ssub.s32 16, 1
    %s4 = scalar_lea.vmem %s0, 124
    %v5 = vld [vmem:[%s4] sm:%s3]
    %s6 = scalar_lea.vmem [#allocation0], 248
    %7 = vst [vmem:[%s6] sm:%s3] %v5
    %s8 = scalar_lea.vmem %s0, 120
    %v9 = vld [vmem:[%s8] sm:%s3]
    %s10 = scalar_lea.vmem [#allocation0], 240
    %11 = vst [vmem:[%s10] sm:%s3] %v9
    %s12 = scalar_lea.vmem %s0, 116
    %v13 = vld [vmem:[%s12] sm:%s3]
    %s14 = scalar_lea.vmem [#allocation0], 232
    %15 = vst [vmem:[%s14] sm:%s3] %v13
    %s16 = scalar_lea.vmem %s0, 112
    %v17 = vld [vmem:[%s16] sm:%s3]
    %s18 = scalar_lea.vmem [#allocation0], 224
    %19 = vst [vmem:[%s18] sm:%s3] %v17
    %s20 = scalar_lea.vmem %s0, 108
    %v21 = vld [vmem:[%s20] sm:%s3]
    %s22 = scalar_lea.vmem [#allocation0], 216
    %23 = vst [vmem:[%s22] sm:%s3] %v21
    %s24 = scalar_lea.vmem %s0, 104
    %v25 = vld [vmem:[%s24] sm:%s3]
    %s26 = scalar_lea.vmem [#allocation0], 208
    %27 = vst [vmem:[%s26] sm:%s3] %v25
    %s28 = scalar_lea.vmem %s0, 100
    %v29 = vld [vmem:[%s28] sm:%s3]
    %s30 = scalar_lea.vmem [#allocation0], 200
    %31 = vst [vmem:[%s30] sm:%s3] %v29
    %s32 = scalar_lea.vmem %s0, 96
    %v33 = vld [vmem:[%s32] sm:%s3]
    %s34 = scalar_lea.vmem [#allocation0], 192
    %35 = vst [vmem:[%s34] sm:%s3] %v33
    %s36 = scalar_lea.vmem %s0, 92
    %v37 = vld [vmem:[%s36] sm:%s3]
    %s38 = scalar_lea.vmem [#allocation0], 184
    %39 = vst [vmem:[%s38] sm:%s3] %v37
    %s40 = scalar_lea.vmem %s0, 88
    %v41 = vld [vmem:[%s40] sm:%s3]
    %s42 = scalar_lea.vmem [#allocation0], 176
    %43 = vst [vmem:[%s42] sm:%s3] %v41
    %s44 = scalar_lea.vmem %s0, 84
    %v45 = vld [vmem:[%s44] sm:%s3]
    %s46 = scalar_lea.vmem [#allocation0], 168
    %47 = vst [vmem:[%s46] sm:%s3] %v45
    %s48 = scalar_lea.vmem %s0, 80
    %v49 = vld [vmem:[%s48] sm:%s3]
    %s50 = scalar_lea.vmem [#allocation0], 160
    %51 = vst [vmem:[%s50] sm:%s3] %v49
    %s52 = scalar_lea.vmem %s0, 76
    %v53 = vld [vmem:[%s52] sm:%s3]
    %s54 = scalar_lea.vmem [#allocation0], 152
    %55 = vst [vmem:[%s54] sm:%s3] %v53
    %s56 = scalar_lea.vmem %s0, 72
    %v57 = vld [vmem:[%s56] sm:%s3]
    %s58 = scalar_lea.vmem [#allocation0], 144
    %59 = vst [vmem:[%s58] sm:%s3] %v57
    %s60 = scalar_lea.vmem %s0, 68
    %v61 = vld [vmem:[%s60] sm:%s3]
    %s62 = scalar_lea.vmem [#allocation0], 136
    %63 = vst [vmem:[%s62] sm:%s3] %v61
    %s64 = scalar_lea.vmem %s0, 64
    %v65 = vld [vmem:[%s64] sm:%s3]
    %s66 = scalar_lea.vmem [#allocation0], 128
    %67 = vst [vmem:[%s66] sm:%s3] %v65
    %s68 = scalar_lea.vmem %s0, 60
    %v69 = vld [vmem:[%s68] sm:%s3]
    %s70 = scalar_lea.vmem [#allocation0], 120
    %71 = vst [vmem:[%s70] sm:%s3] %v69
    %s72 = scalar_lea.vmem %s0, 56
    %v73 = vld [vmem:[%s72] sm:%s3]
    %s74 = scalar_lea.vmem [#allocation0], 112
    %75 = vst [vmem:[%s74] sm:%s3] %v73
    %s76 = scalar_lea.vmem %s0, 52
    %v77 = vld [vmem:[%s76] sm:%s3]
    %s78 = scalar_lea.vmem [#allocation0], 104
    %79 = vst [vmem:[%s78] sm:%s3] %v77
    %s80 = scalar_lea.vmem %s0, 48
    %v81 = vld [vmem:[%s80] sm:%s3]
    %s82 = scalar_lea.vmem [#allocation0], 96
    %83 = vst [vmem:[%s82] sm:%s3] %v81
    %s84 = scalar_lea.vmem %s0, 44
    %v85 = vld [vmem:[%s84] sm:%s3]
    %s86 = scalar_lea.vmem [#allocation0], 88
    %87 = vst [vmem:[%s86] sm:%s3] %v85
    %s88 = scalar_lea.vmem %s0, 40
    %v89 = vld [vmem:[%s88] sm:%s3]
    %s90 = scalar_lea.vmem [#allocation0], 80
    %91 = vst [vmem:[%s90] sm:%s3] %v89
    %s92 = scalar_lea.vmem %s0, 36
    %v93 = vld [vmem:[%s92] sm:%s3]
    %s94 = scalar_lea.vmem [#allocation0], 72
    %95 = vst [vmem:[%s94] sm:%s3] %v93
    %s96 = scalar_lea.vmem %s0, 32
    %v97 = vld [vmem:[%s96] sm:%s3]
    %s98 = scalar_lea.vmem [#allocation0], 64
    %99 = vst [vmem:[%s98] sm:%s3] %v97
    %s100 = scalar_lea.vmem %s0, 28
    %v101 = vld [vmem:[%s100] sm:%s3]
    %s102 = scalar_lea.vmem [#allocation0], 56
    %103 = vst [vmem:[%s102] sm:%s3] %v101
    %s104 = scalar_lea.vmem %s0, 24
    %v105 = vld [vmem:[%s104] sm:%s3]
    %s106 = scalar_lea.vmem [#allocation0], 48
    %107 = vst [vmem:[%s106] sm:%s3] %v105
    %s108 = scalar_lea.vmem %s0, 20
    %v109 = vld [vmem:[%s108] sm:%s3]
    %s110 = scalar_lea.vmem [#allocation0], 40
    %111 = vst [vmem:[%s110] sm:%s3] %v109
    %s112 = scalar_lea.vmem %s0, 16
    %v113 = vld [vmem:[%s112] sm:%s3]
    %s114 = scalar_lea.vmem [#allocation0], 32
    %115 = vst [vmem:[%s114] sm:%s3] %v113
    %s116 = scalar_lea.vmem %s0, 12
    %v117 = vld [vmem:[%s116] sm:%s3]
    %s118 = scalar_lea.vmem [#allocation0], 24
    %119 = vst [vmem:[%s118] sm:%s3] %v117
    %s120 = scalar_lea.vmem %s0, 8
    %v121 = vld [vmem:[%s120] sm:%s3]
    %s122 = scalar_lea.vmem [#allocation0], 16
    %123 = vst [vmem:[%s122] sm:%s3] %v121
    %s124 = scalar_lea.vmem %s0, 4
    %v125 = vld [vmem:[%s124] sm:%s3]
    %s126 = scalar_lea.vmem [#allocation0], 8
    %127 = vst [vmem:[%s126] sm:%s3] %v125
    %v128 = vld [vmem:[%s0] sm:%s3]
    %129 = vst [vmem:[#allocation0] sm:%s3] %v128
    %v130 = vld [vmem:[#allocation0] ss:$8 sm:$0xf]
    %v131 = vld [vmem:[#allocation0] ss:$8 sm:$0xf0]
    %vm132 = vcmask 1047556
    %v133 = vsel %vm132, %v131, %v130
    %vm134 = vcmask 261120
    %135 = vst.msk [vmem:[%s1] sm:$0xff] %vm134, %v133
    %s136 = scalar_lea.vmem [#allocation0], 64
    %v137 = vld [vmem:[%s136] ss:$8 sm:$0xf]
    %s138 = scalar_lea.vmem [#allocation0], 64
    %v139 = vld [vmem:[%s138] ss:$8 sm:$0xf0]
    %vm140 = vcmask 1047556
    %v141 = vsel %vm140, %v139, %v137
    %vm142 = vcmask 261120
    %s143 = scalar_lea.vmem %s1, 8
    %144 = vst.msk [vmem:[%s143] sm:$0xff] %vm142, %v141
    %s145 = scalar_lea.vmem [#allocation0], 128
    %v146 = vld [vmem:[%s145] ss:$8 sm:$0xf]
    %s147 = scalar_lea.vmem [#allocation0], 128
    %v148 = vld [vmem:[%s147] ss:$8 sm:$0xf0]
    %vm149 = vcmask 1047556
    %v150 = vsel %vm149, %v148, %v146
    %vm151 = vcmask 261120
    %s152 = scalar_lea.vmem %s1, 16
    %153 = vst.msk [vmem:[%s152] sm:$0xff] %vm151, %v150
    %s154 = scalar_lea.vmem [#allocation0], 192
    %v155 = vld [vmem:[%s154] ss:$8 sm:$0xf]
    %s156 = scalar_lea.vmem [#allocation0], 192
    %v157 = vld [vmem:[%s156] ss:$8 sm:$0xf0]
    %vm158 = vcmask 1047556
    %v159 = vsel %vm158, %v157, %v155
    %vm160 = vcmask 261120
    %s161 = scalar_lea.vmem %s1, 24
    %162 = vst.msk [vmem:[%s161] sm:$0xff] %vm160, %v159
    %s163 = scalar_lea.vmem [#allocation0], 3
    %v164 = vld [vmem:[%s163] ss:$8 sm:$0xf]
    %s165 = scalar_lea.vmem [#allocation0], 3
    %v166 = vld [vmem:[%s165] ss:$8 sm:$0xf0]
    %vm167 = vcmask 1047556
    %v168 = vsel %vm167, %v166, %v164
    %169 = vrot.lane.b32.xlu0 %v168, 96
    %v170 = vpop.permute.xlu0 %169
    %vm171 = vcmask 1048320
    %172 = vst.msk [vmem:[%s1] sm:$0xff] %vm171, %v170
    %s173 = scalar_lea.vmem [#allocation0], 67
    %v174 = vld [vmem:[%s173] ss:$8 sm:$0xf]
    %s175 = scalar_lea.vmem [#allocation0], 67
    %v176 = vld [vmem:[%s175] ss:$8 sm:$0xf0]
    %vm177 = vcmask 1047556
    %v178 = vsel %vm177, %v176, %v174
    %179 = vrot.lane.b32.xlu0 %v178, 96
    %v180 = vpop.permute.xlu0 %179
    %vm181 = vcmask 1048320
    %s182 = scalar_lea.vmem %s1, 8
    %183 = vst.msk [vmem:[%s182] sm:$0xff] %vm181, %v180
    %s184 = scalar_lea.vmem [#allocation0], 131
    %v185 = vld [vmem:[%s184] ss:$8 sm:$0xf]
    %s186 = scalar_lea.vmem [#allocation0], 131
    %v187 = vld [vmem:[%s186] ss:$8 sm:$0xf0]
    %vm188 = vcmask 1047556
    %v189 = vsel %vm188, %v187, %v185
    %190 = vrot.lane.b32.xlu0 %v189, 96
    %v191 = vpop.permute.xlu0 %190
    %vm192 = vcmask 1048320
    %s193 = scalar_lea.vmem %s1, 16
    %194 = vst.msk [vmem:[%s193] sm:$0xff] %vm192, %v191
    %s195 = scalar_lea.vmem [#allocation0], 195
    %v196 = vld [vmem:[%s195] ss:$8 sm:$0xf]
    %s197 = scalar_lea.vmem [#allocation0], 195
    %v198 = vld [vmem:[%s197] ss:$8 sm:$0xf0]
    %vm199 = vcmask 1047556
    %v200 = vsel %vm199, %v198, %v196
    %201 = vrot.lane.b32.xlu0 %v200, 96
    %v202 = vpop.permute.xlu0 %201
    %vm203 = vcmask 1048320
    %s204 = scalar_lea.vmem %s1, 24
    %205 = vst.msk [vmem:[%s204] sm:$0xff] %vm203, %v202
    %s206 = scalar_lea.vmem [#allocation0], 2
    %v207 = vld [vmem:[%s206] ss:$8 sm:$0xf]
    %s208 = scalar_lea.vmem [#allocation0], 2
    %v209 = vld [vmem:[%s208] ss:$8 sm:$0xf0]
    %vm210 = vcmask 1047556
    %v211 = vsel %vm210, %v209, %v207
    %212 = vrot.lane.b32.xlu0 %v211, 64
    %v213 = vpop.permute.xlu0 %212
    %vm214 = vcmask 785920
    %215 = vst.msk [vmem:[%s1] sm:$0xff] %vm214, %v213
    %s216 = scalar_lea.vmem [#allocation0], 66
    %v217 = vld [vmem:[%s216] ss:$8 sm:$0xf]
    %s218 = scalar_lea.vmem [#allocation0], 66
    %v219 = vld [vmem:[%s218] ss:$8 sm:$0xf0]
    %vm220 = vcmask 1047556
    %v221 = vsel %vm220, %v219, %v217
    %222 = vrot.lane.b32.xlu0 %v221, 64
    %v223 = vpop.permute.xlu0 %222
    %vm224 = vcmask 785920
    %s225 = scalar_lea.vmem %s1, 8
    %226 = vst.msk [vmem:[%s225] sm:$0xff] %vm224, %v223
    %s227 = scalar_lea.vmem [#allocation0], 130
    %v228 = vld [vmem:[%s227] ss:$8 sm:$0xf]
    %s229 = scalar_lea.vmem [#allocation0], 130
    %v230 = vld [vmem:[%s229] ss:$8 sm:$0xf0]
    %vm231 = vcmask 1047556
    %v232 = vsel %vm231, %v230, %v228
    %233 = vrot.lane.b32.xlu0 %v232, 64
    %v234 = vpop.permute.xlu0 %233
    %vm235 = vcmask 785920
    %s236 = scalar_lea.vmem %s1, 16
    %237 = vst.msk [vmem:[%s236] sm:$0xff] %vm235, %v234
    %s238 = scalar_lea.vmem [#allocation0], 194
    %v239 = vld [vmem:[%s238] ss:$8 sm:$0xf]
    %s240 = scalar_lea.vmem [#allocation0], 194
    %v241 = vld [vmem:[%s240] ss:$8 sm:$0xf0]
    %vm242 = vcmask 1047556
    %v243 = vsel %vm242, %v241, %v239
    %244 = vrot.lane.b32.xlu0 %v243, 64
    %v245 = vpop.permute.xlu0 %244
    %vm246 = vcmask 785920
    %s247 = scalar_lea.vmem %s1, 24
    %248 = vst.msk [vmem:[%s247] sm:$0xff] %vm246, %v245
    %s249 = scalar_lea.vmem [#allocation0], 1
    %v250 = vld [vmem:[%s249] ss:$8 sm:$0xf]
    %s251 = scalar_lea.vmem [#allocation0], 1
    %v252 = vld [vmem:[%s251] ss:$8 sm:$0xf0]
    %vm253 = vcmask 1047556
    %v254 = vsel %vm253, %v252, %v250
    %255 = vrot.lane.b32.xlu0 %v254, 32
    %v256 = vpop.permute.xlu0 %255
    %vm257 = vcmask 523520
    %258 = vst.msk [vmem:[%s1] sm:$0xff] %vm257, %v256
    %s259 = scalar_lea.vmem [#allocation0], 65
    %v260 = vld [vmem:[%s259] ss:$8 sm:$0xf]
    %s261 = scalar_lea.vmem [#allocation0], 65
    %v262 = vld [vmem:[%s261] ss:$8 sm:$0xf0]
    %vm263 = vcmask 1047556
    %v264 = vsel %vm263, %v262, %v260
    %265 = vrot.lane.b32.xlu0 %v264, 32
    %v266 = vpop.permute.xlu0 %265
    %vm267 = vcmask 523520
    %s268 = scalar_lea.vmem %s1, 8
    %269 = vst.msk [vmem:[%s268] sm:$0xff] %vm267, %v266
    %s270 = scalar_lea.vmem [#allocation0], 129
    %v271 = vld [vmem:[%s270] ss:$8 sm:$0xf]
    %s272 = scalar_lea.vmem [#allocation0], 129
    %v273 = vld [vmem:[%s272] ss:$8 sm:$0xf0]
    %vm274 = vcmask 1047556
    %v275 = vsel %vm274, %v273, %v271
    %276 = vrot.lane.b32.xlu0 %v275, 32
    %v277 = vpop.permute.xlu0 %276
    %vm278 = vcmask 523520
    %s279 = scalar_lea.vmem %s1, 16
    %280 = vst.msk [vmem:[%s279] sm:$0xff] %vm278, %v277
    %s281 = scalar_lea.vmem [#allocation0], 193
    %v282 = vld [vmem:[%s281] ss:$8 sm:$0xf]
    %s283 = scalar_lea.vmem [#allocation0], 193
    %v284 = vld [vmem:[%s283] ss:$8 sm:$0xf0]
    %vm285 = vcmask 1047556
    %v286 = vsel %vm285, %v284, %v282
    %287 = vrot.lane.b32.xlu0 %v286, 32
    %v288 = vpop.permute.xlu0 %287
    %vm289 = vcmask 523520
    %s290 = scalar_lea.vmem %s1, 24
    %291 = vst.msk [vmem:[%s290] sm:$0xff] %vm289, %v288

// kernel: squeeze.1
$region0: #{squeeze.1}
  %s0 = inlined_call_operand.vmem [shape: f32[16], index: 0, kind: input, shape index: {}]
  %s1 = inlined_call_operand.hbm [shape: f32[2,8,1], index: 1, kind: output, shape index: {}]
  $region1: #{squeeze.1} parent=0
    #allocation0 [shape = 'u8[1024]{0}', space=vmem, size = 0x400, scoped, tag = 'operand span for operand 1']
    #allocation1 [shape = 's32[1]{0}', space=sflag, size = 0x4, scoped, tag = 'scoped memory for squeeze.1']
    #allocation2 [shape = 'u8[4096]{0}', space=vmem, size = 0x1000, scoped, tag = 'scoped mem for output reshape']
    #allocation3 [shape = 'u8[4096]{0}', space=vmem, size = 0x1000, scoped, tag = 'scoped mem for input reshape']
    %2 = vsyncpa [#allocation1], 0
    %s4 = ssub.s32 2, 1
    %v5 = vld [vmem:[%s0] sm:%s4]
    %6 = vst [vmem:[#allocation3] sm:%s4] %v5
    %v7 = vld [vmem:[#allocation3] sm:$0x1]
    %vm8 = vcmask 64512
    %9 = vst.msk [vmem:[#allocation2] sm:$0x1] %vm8, %v7
    %v10 = vld [vmem:[#allocation3] sm:$0x1]
    %11 = vrot.lane.b32.xlu0 %v10, 120
    %v12 = vpop.permute.xlu0 %11
    %vm13 = vcmask 64512
    %s14 = scalar_lea.vmem [#allocation2], 1
    %15 = vst.msk [vmem:[%s14] sm:$0x1] %vm13, %v12
    %s17 = ssub.s32 4, 1
    %v18 = vld [vmem:[#allocation2] sm:%s17]
    %s20 = ssub.s32 4, 1
    %21 = vst [vmem:[#allocation0] sm:%s20] %v18
    %23 = vsyncadd [#allocation1], 0
    %s25 = sshll.u32 [#allocation0], 4
    %s26 = int_to_ptr.vmem [resolvable:$true] %s25
    %s27 = sshll.u32 %s1, 4
    %s28 = int_to_ptr.hbm [resolvable:$true] %s27
    %30 = dma.vmem_to_hbm [thread:$0]  %s26, 32, %s28, [#allocation1]
    %32 = dma.done [#allocation1], 32
    %33 = vsyncpa [#allocation1], 1

// kernel: qgnn_mixer_forward.1
$region0: #{qgnn_mixer_forward.1}
  #allocation0 [shape = 'u32[]', space=smem, size = 0x4, offset = 0x4, fixed_abs, tag = 'smem constant byte address 0x4 - core index']
  #allocation1 [shape = 'u32[72,128]{1,0:T(1,128)}', space=vmem, size = 0x9000, scoped, tag = 'internal scratch']
  #allocation2 [shape = 'f32[1,1]{1,0:T(1,128)S(1)}', space=vmem, size = 0x200, scoped, tag = 'scoped memory for qgnn_mixer_forward.1']
  %s0 = inlined_call_operand.vmem [shape: f32[8,128], index: 0, kind: input, shape index: {}]
  %s1 = inlined_call_operand.vmem [shape: f32[128,8], index: 1, kind: input, shape index: {}]
  %s2 = inlined_call_operand.vmem [shape: f32[128,128], index: 2, kind: input, shape index: {}]
  %s3 = inlined_call_operand.vmem [shape: f32[128,1], index: 3, kind: input, shape index: {}]
  %s4 = inlined_call_operand.vmem [shape: f32[32,128], index: 4, kind: input, shape index: {}]
  %s5 = inlined_call_operand.vmem [shape: f32[32,1], index: 5, kind: input, shape index: {}]
  %s6 = inlined_call_operand.vmem [shape: f32[1,32], index: 6, kind: input, shape index: {}]
  %s7 = inlined_call_operand.<no memory space> [shape: f32[1,1], index: 7, kind: input, shape index: {}]
  %s8 = inlined_call_operand.vmem [shape: f32[1,128], index: 8, kind: output, shape index: {}]
  %s9 = sld [smem:[#allocation0]]
  $region42: #{qgnn_mixer_forward.1} parent=0
    _
  %s11 = ssub.s32 1, %s9
  %s12 = scalar_select 0, %s11, %s9
  %v13 = vstv %s7
  %14 = vst [vmem:[#allocation2] sm:$0x1] %v13
  // Predicated region
  $region2: #{qgnn_mixer_forward.1} parent=0 // pred_check
    _
  $region3: #{qgnn_mixer_forward.1} parent=0 // pred_check_branch
    %16 = sbr.rel (0) target = $region5
  $region4: #{qgnn_mixer_forward.1} parent=0 // pred_region
    _
  $region5: #{qgnn_mixer_forward.1} parent=0 // pred_fallthru
    _
  // Predicated region
  $region6: #{qgnn_mixer_forward.1} parent=0 // pred_check
    _
  $region7: #{qgnn_mixer_forward.1} parent=0 // pred_check_branch
    %18 = sbr.rel (0) target = $region9
  $region8: #{qgnn_mixer_forward.1} parent=0 // pred_region
    _
  $region9: #{qgnn_mixer_forward.1} parent=0 // pred_fallthru
    _
  // Predicated region
  $region10: #{qgnn_mixer_forward.1} parent=0 // pred_check
    _
  $region11: #{qgnn_mixer_forward.1} parent=0 // pred_check_branch
    %20 = sbr.rel (0) target = $region13
  $region12: #{qgnn_mixer_forward.1} parent=0 // pred_region
    _
  $region13: #{qgnn_mixer_forward.1} parent=0 // pred_fallthru
    _
  // Predicated region
  $region14: #{qgnn_mixer_forward.1} parent=0 // pred_check
    _
  $region15: #{qgnn_mixer_forward.1} parent=0 // pred_check_branch
    %22 = sbr.rel (0) target = $region17
  $region16: #{qgnn_mixer_forward.1} parent=0 // pred_region
    _
  $region17: #{qgnn_mixer_forward.1} parent=0 // pred_fallthru
    _
  // Predicated region
  $region18: #{qgnn_mixer_forward.1} parent=0 // pred_check
    _
  $region19: #{qgnn_mixer_forward.1} parent=0 // pred_check_branch
    %24 = sbr.rel (0) target = $region21
  $region20: #{qgnn_mixer_forward.1} parent=0 // pred_region
    _
  $region21: #{qgnn_mixer_forward.1} parent=0 // pred_fallthru
    _
  // Predicated region
  $region22: #{qgnn_mixer_forward.1} parent=0 // pred_check
    _
  $region23: #{qgnn_mixer_forward.1} parent=0 // pred_check_branch
    %26 = sbr.rel (0) target = $region25
  $region24: #{qgnn_mixer_forward.1} parent=0 // pred_region
    _
  $region25: #{qgnn_mixer_forward.1} parent=0 // pred_fallthru
    _
  // Predicated region
  $region26: #{qgnn_mixer_forward.1} parent=0 // pred_check
    _
  $region27: #{qgnn_mixer_forward.1} parent=0 // pred_check_branch
    %28 = sbr.rel (0) target = $region29
  $region28: #{qgnn_mixer_forward.1} parent=0 // pred_region
    _
  $region29: #{qgnn_mixer_forward.1} parent=0 // pred_fallthru
    _
  // Predicated region
  $region30: #{qgnn_mixer_forward.1} parent=0 // pred_check
    _
  $region31: #{qgnn_mixer_forward.1} parent=0 // pred_check_branch
    %30 = sbr.rel (0) target = $region33
  $region32: #{qgnn_mixer_forward.1} parent=0 // pred_region
    _
  $region33: #{qgnn_mixer_forward.1} parent=0 // pred_fallthru
    _
  %v31 = vld [vmem:[%s0] sm:$0xff]
  %v32 = vld [vmem:[%s1] sm:$0xff]
  %v33 = vld [vmem:[%s1 + $0x8] sm:$0xff]
  %v34 = vld [vmem:[%s1 + $0x10] sm:$0xff]
  %v35 = vld [vmem:[%s1 + $0x18] sm:$0xff]
  %v36 = vld [vmem:[%s1 + $0x20] sm:$0xff]
  %v37 = vld [vmem:[%s1 + $0x28] sm:$0xff]
  %v38 = vld [vmem:[%s1 + $0x30] sm:$0xff]
  %v39 = vld [vmem:[%s1 + $0x38] sm:$0xff]
  %v40 = vld [vmem:[%s1 + $0x40] sm:$0xff]
  %v41 = vld [vmem:[%s1 + $0x48] sm:$0xff]
  %v42 = vld [vmem:[%s1 + $0x50] sm:$0xff]
  %v43 = vld [vmem:[%s1 + $0x58] sm:$0xff]
  %v44 = vld [vmem:[%s1 + $0x60] sm:$0xff]
  %v45 = vld [vmem:[%s1 + $0x68] sm:$0xff]
  %v46 = vld [vmem:[%s1 + $0x70] sm:$0xff]
  %v47 = vld [vmem:[%s1 + $0x78] sm:$0xff]
  %vm48 = vcmask 64512
  %v50 = vsel %vm48, %v32, 0
  %v53 = vsel %vm48, %v33, 0
  %v56 = vsel %vm48, %v34, 0
  %v59 = vsel %vm48, %v35, 0
  %v62 = vsel %vm48, %v36, 0
  %v65 = vsel %vm48, %v37, 0
  %v68 = vsel %vm48, %v38, 0
  %v71 = vsel %vm48, %v39, 0
  %v74 = vsel %vm48, %v40, 0
  %v77 = vsel %vm48, %v41, 0
  %v80 = vsel %vm48, %v42, 0
  %v83 = vsel %vm48, %v43, 0
  %v86 = vsel %vm48, %v44, 0
  %v89 = vsel %vm48, %v45, 0
  %v92 = vsel %vm48, %v46, 0
  %v95 = vsel %vm48, %v47, 0
  %97 = vmatpush.msra.mxu0 0.0
  %98 = vmatpush.msra.mxu0 0.0
  %99 = vmatpush.msra.mxu0 0.0
  %100 = vmatpush.msra.mxu0 0.0
  %101 = vmatpush.msra.mxu0 0.0
  %102 = vmatpush.msra.mxu0 0.0
  %103 = vmatpush.msra.mxu0 0.0
  %104 = vmatpush.msra.mxu0 0.0
  %105 = vmatpush.msra.mxu0 0.0
  %106 = vmatpush.msra.mxu0 0.0
  %107 = vmatpush.msra.mxu0 0.0
  %108 = vmatpush.msra.mxu0 0.0
  %109 = vmatpush.msra.mxu0 0.0
  %110 = vmatpush.msra.mxu0 0.0
  %111 = vmatpush.msra.mxu0 0.0
  %112 = vmatpush.msra.mxu0 %v31
  %113 = vmatmul.f32.gmra.mxu0 %v50
  %v114 = vpop.f32.mrf.mxu0
  %v115 = vadd.f32 0.0, %v114
  %116 = vmatmul.f32.gmra.mxu0 %v53
  %v117 = vpop.f32.mrf.mxu0
  %v118 = vadd.f32 0.0, %v117
  %119 = vmatmul.f32.gmra.mxu0 %v56
  %v120 = vpop.f32.mrf.mxu0
  %v121 = vadd.f32 0.0, %v120
  %122 = vmatmul.f32.gmra.mxu0 %v59
  %v123 = vpop.f32.mrf.mxu0
  %v124 = vadd.f32 0.0, %v123
  %125 = vmatmul.f32.gmra.mxu0 %v62
  %v126 = vpop.f32.mrf.mxu0
  %v127 = vadd.f32 0.0, %v126
  %128 = vmatmul.f32.gmra.mxu0 %v65
  %v129 = vpop.f32.mrf.mxu0
  %v130 = vadd.f32 0.0, %v129
  %131 = vmatmul.f32.gmra.mxu0 %v68
  %v132 = vpop.f32.mrf.mxu0
  %v133 = vadd.f32 0.0, %v132
  %134 = vmatmul.f32.gmra.mxu0 %v71
  %v135 = vpop.f32.mrf.mxu0
  %v136 = vadd.f32 0.0, %v135
  %137 = vmatmul.f32.gmra.mxu0 %v74
  %v138 = vpop.f32.mrf.mxu0
  %v139 = vadd.f32 0.0, %v138
  %140 = vmatmul.f32.gmra.mxu0 %v77
  %v141 = vpop.f32.mrf.mxu0
  %v142 = vadd.f32 0.0, %v141
  %143 = vmatmul.f32.gmra.mxu0 %v80
  %v144 = vpop.f32.mrf.mxu0
  %v145 = vadd.f32 0.0, %v144
  %146 = vmatmul.f32.gmra.mxu0 %v83
  %v147 = vpop.f32.mrf.mxu0
  %v148 = vadd.f32 0.0, %v147
  %149 = vmatmul.f32.gmra.mxu0 %v86
  %v150 = vpop.f32.mrf.mxu0
  %v151 = vadd.f32 0.0, %v150
  %152 = vmatmul.f32.gmra.mxu0 %v89
  %v153 = vpop.f32.mrf.mxu0
  %v154 = vadd.f32 0.0, %v153
  %155 = vmatmul.f32.gmra.mxu0 %v92
  %v156 = vpop.f32.mrf.mxu0
  %v157 = vadd.f32 0.0, %v156
  %158 = vmatmul.f32.gmra.mxu0 %v95
  %v159 = vpop.f32.mrf.mxu0
  %v160 = vadd.f32 0.0, %v159
  %161 = vdwg.mxu0
  %v162 = vmax.f32 %v115, 0.0
  %v163 = vmax.f32 %v118, 0.0
  %v164 = vmax.f32 %v121, 0.0
  %v165 = vmax.f32 %v124, 0.0
  %v166 = vmax.f32 %v127, 0.0
  %v167 = vmax.f32 %v130, 0.0
  %v168 = vmax.f32 %v133, 0.0
  %v169 = vmax.f32 %v136, 0.0
  %v170 = vmax.f32 %v139, 0.0
  %v171 = vmax.f32 %v142, 0.0
  %v172 = vmax.f32 %v145, 0.0
  %v173 = vmax.f32 %v148, 0.0
  %v174 = vmax.f32 %v151, 0.0
  %v175 = vmax.f32 %v154, 0.0
  %v176 = vmax.f32 %v157, 0.0
  %v177 = vmax.f32 %v160, 0.0
  %v178 = vld [vmem:[%s2] sm:$0xff]
  %v179 = vld [vmem:[%s2 + $0x8] sm:$0xff]
  %v180 = vld [vmem:[%s2 + $0x10] sm:$0xff]
  %v181 = vld [vmem:[%s2 + $0x18] sm:$0xff]
  %v182 = vld [vmem:[%s2 + $0x20] sm:$0xff]
  %v183 = vld [vmem:[%s2 + $0x28] sm:$0xff]
  %v184 = vld [vmem:[%s2 + $0x30] sm:$0xff]
  %v185 = vld [vmem:[%s2 + $0x38] sm:$0xff]
  %v186 = vld [vmem:[%s2 + $0x40] sm:$0xff]
  %v187 = vld [vmem:[%s2 + $0x48] sm:$0xff]
  %v188 = vld [vmem:[%s2 + $0x50] sm:$0xff]
  %v189 = vld [vmem:[%s2 + $0x58] sm:$0xff]
  %v190 = vld [vmem:[%s2 + $0x60] sm:$0xff]
  %v191 = vld [vmem:[%s2 + $0x68] sm:$0xff]
  %v192 = vld [vmem:[%s2 + $0x70] sm:$0xff]
  %v193 = vld [vmem:[%s2 + $0x78] sm:$0xff]
  %v194 = vld [vmem:[%s3] sm:$0xff]
  %v195 = vld [vmem:[%s3 + $0x8] sm:$0xff]
  %v196 = vld [vmem:[%s3 + $0x10] sm:$0xff]
  %v197 = vld [vmem:[%s3 + $0x18] sm:$0xff]
  %v198 = vld [vmem:[%s3 + $0x20] sm:$0xff]
  %v199 = vld [vmem:[%s3 + $0x28] sm:$0xff]
  %v200 = vld [vmem:[%s3 + $0x30] sm:$0xff]
  %v201 = vld [vmem:[%s3 + $0x38] sm:$0xff]
  %v202 = vld [vmem:[%s3 + $0x40] sm:$0xff]
  %v203 = vld [vmem:[%s3 + $0x48] sm:$0xff]
  %v204 = vld [vmem:[%s3 + $0x50] sm:$0xff]
  %v205 = vld [vmem:[%s3 + $0x58] sm:$0xff]
  %v206 = vld [vmem:[%s3 + $0x60] sm:$0xff]
  %v207 = vld [vmem:[%s3 + $0x68] sm:$0xff]
  %v208 = vld [vmem:[%s3 + $0x70] sm:$0xff]
  %v209 = vld [vmem:[%s3 + $0x78] sm:$0xff]
  %211 = vset.pattern.permute.xlu0 0
  %212 = vperm.xlu0 %211, %v194
  %v213 = vpop.permute.xlu0 %212
  %216 = vset.pattern.permute.xlu0 0
  %217 = vperm.xlu0 %216, %v195
  %v218 = vpop.permute.xlu0 %217
  %221 = vset.pattern.permute.xlu0 0
  %222 = vperm.xlu0 %221, %v196
  %v223 = vpop.permute.xlu0 %222
  %226 = vset.pattern.permute.xlu0 0
  %227 = vperm.xlu0 %226, %v197
  %v228 = vpop.permute.xlu0 %227
  %231 = vset.pattern.permute.xlu0 0
  %232 = vperm.xlu0 %231, %v198
  %v233 = vpop.permute.xlu0 %232
  %236 = vset.pattern.permute.xlu0 0
  %237 = vperm.xlu0 %236, %v199
  %v238 = vpop.permute.xlu0 %237
  %241 = vset.pattern.permute.xlu0 0
  %242 = vperm.xlu0 %241, %v200
  %v243 = vpop.permute.xlu0 %242
  %246 = vset.pattern.permute.xlu0 0
  %247 = vperm.xlu0 %246, %v201
  %v248 = vpop.permute.xlu0 %247
  %251 = vset.pattern.permute.xlu0 0
  %252 = vperm.xlu0 %251, %v202
  %v253 = vpop.permute.xlu0 %252
  %256 = vset.pattern.permute.xlu0 0
  %257 = vperm.xlu0 %256, %v203
  %v258 = vpop.permute.xlu0 %257
  %261 = vset.pattern.permute.xlu0 0
  %262 = vperm.xlu0 %261, %v204
  %v263 = vpop.permute.xlu0 %262
  %266 = vset.pattern.permute.xlu0 0
  %267 = vperm.xlu0 %266, %v205
  %v268 = vpop.permute.xlu0 %267
  %271 = vset.pattern.permute.xlu0 0
  %272 = vperm.xlu0 %271, %v206
  %v273 = vpop.permute.xlu0 %272
  %276 = vset.pattern.permute.xlu0 0
  %277 = vperm.xlu0 %276, %v207
  %v278 = vpop.permute.xlu0 %277
  %281 = vset.pattern.permute.xlu0 0
  %282 = vperm.xlu0 %281, %v208
  %v283 = vpop.permute.xlu0 %282
  %286 = vset.pattern.permute.xlu0 0
  %287 = vperm.xlu0 %286, %v209
  %v288 = vpop.permute.xlu0 %287
  %290 = vmatpush.msra.mxu0 %v177
  %291 = vmatpush.msra.mxu0 %v176
  %292 = vmatpush.msra.mxu0 %v175
  %293 = vmatpush.msra.mxu0 %v174
  %294 = vmatpush.msra.mxu0 %v173
  %295 = vmatpush.msra.mxu0 %v172
  %296 = vmatpush.msra.mxu0 %v171
  %297 = vmatpush.msra.mxu0 %v170
  %298 = vmatpush.msra.mxu0 %v169
  %299 = vmatpush.msra.mxu0 %v168
  %300 = vmatpush.msra.mxu0 %v167
  %301 = vmatpush.msra.mxu0 %v166
  %302 = vmatpush.msra.mxu0 %v165
  %303 = vmatpush.msra.mxu0 %v164
  %304 = vmatpush.msra.mxu0 %v163
  %305 = vmatpush.msra.mxu0 %v162
  %306 = vmatmul.f32.gmra.mxu0 %v178
  %v307 = vpop.f32.mrf.mxu0
  %v308 = vadd.f32 %v213, %v307
  %309 = vmatmul.f32.gmra.mxu0 %v179
  %v310 = vpop.f32.mrf.mxu0
  %v311 = vadd.f32 %v218, %v310
  %312 = vmatmul.f32.gmra.mxu0 %v180
  %v313 = vpop.f32.mrf.mxu0
  %v314 = vadd.f32 %v223, %v313
  %315 = vmatmul.f32.gmra.mxu0 %v181
  %v316 = vpop.f32.mrf.mxu0
  %v317 = vadd.f32 %v228, %v316
  %318 = vmatmul.f32.gmra.mxu0 %v182
  %v319 = vpop.f32.mrf.mxu0
  %v320 = vadd.f32 %v233, %v319
  %321 = vmatmul.f32.gmra.mxu0 %v183
  %v322 = vpop.f32.mrf.mxu0
  %v323 = vadd.f32 %v238, %v322
  %324 = vmatmul.f32.gmra.mxu0 %v184
  %v325 = vpop.f32.mrf.mxu0
  %v326 = vadd.f32 %v243, %v325
  %327 = vmatmul.f32.gmra.mxu0 %v185
  %v328 = vpop.f32.mrf.mxu0
  %v329 = vadd.f32 %v248, %v328
  %330 = vmatmul.f32.gmra.mxu0 %v186
  %v331 = vpop.f32.mrf.mxu0
  %v332 = vadd.f32 %v253, %v331
  %333 = vmatmul.f32.gmra.mxu0 %v187
  %v334 = vpop.f32.mrf.mxu0
  %v335 = vadd.f32 %v258, %v334
  %336 = vmatmul.f32.gmra.mxu0 %v188
  %v337 = vpop.f32.mrf.mxu0
  %v338 = vadd.f32 %v263, %v337
  %339 = vmatmul.f32.gmra.mxu0 %v189
  %v340 = vpop.f32.mrf.mxu0
  %v341 = vadd.f32 %v268, %v340
  %342 = vmatmul.f32.gmra.mxu0 %v190
  %v343 = vpop.f32.mrf.mxu0
  %v344 = vadd.f32 %v273, %v343
  %345 = vmatmul.f32.gmra.mxu0 %v191
  %v346 = vpop.f32.mrf.mxu0
  %v347 = vadd.f32 %v278, %v346
  %348 = vmatmul.f32.gmra.mxu0 %v192
  %v349 = vpop.f32.mrf.mxu0
  %v350 = vadd.f32 %v283, %v349
  %351 = vmatmul.f32.gmra.mxu0 %v193
  %v352 = vpop.f32.mrf.mxu0
  %v353 = vadd.f32 %v288, %v352
  %354 = vdwg.mxu0
  %v355 = vmax.f32 %v308, 0.0
  %v356 = vmax.f32 %v311, 0.0
  %v357 = vmax.f32 %v314, 0.0
  %v358 = vmax.f32 %v317, 0.0
  %v359 = vmax.f32 %v320, 0.0
  %v360 = vmax.f32 %v323, 0.0
  %v361 = vmax.f32 %v326, 0.0
  %v362 = vmax.f32 %v329, 0.0
  %v363 = vmax.f32 %v332, 0.0
  %v364 = vmax.f32 %v335, 0.0
  %v365 = vmax.f32 %v338, 0.0
  %v366 = vmax.f32 %v341, 0.0
  %v367 = vmax.f32 %v344, 0.0
  %v368 = vmax.f32 %v347, 0.0
  %v369 = vmax.f32 %v350, 0.0
  %v370 = vmax.f32 %v353, 0.0
  %v371 = vld [vmem:[%s4] sm:$0xff]
  %v372 = vld [vmem:[%s4 + $0x8] sm:$0xff]
  %v373 = vld [vmem:[%s4 + $0x10] sm:$0xff]
  %v374 = vld [vmem:[%s4 + $0x18] sm:$0xff]
  %v375 = vld [vmem:[%s5] sm:$0xff]
  %v376 = vld [vmem:[%s5 + $0x8] sm:$0xff]
  %v377 = vld [vmem:[%s5 + $0x10] sm:$0xff]
  %v378 = vld [vmem:[%s5 + $0x18] sm:$0xff]
  %380 = vset.pattern.permute.xlu0 0
  %381 = vperm.xlu0 %380, %v375
  %v382 = vpop.permute.xlu0 %381
  %385 = vset.pattern.permute.xlu0 0
  %386 = vperm.xlu0 %385, %v376
  %v387 = vpop.permute.xlu0 %386
  %390 = vset.pattern.permute.xlu0 0
  %391 = vperm.xlu0 %390, %v377
  %v392 = vpop.permute.xlu0 %391
  %395 = vset.pattern.permute.xlu0 0
  %396 = vperm.xlu0 %395, %v378
  %v397 = vpop.permute.xlu0 %396
  %399 = vmatpush.msra.mxu0 %v370
  %400 = vmatpush.msra.mxu0 %v369
  %401 = vmatpush.msra.mxu0 %v368
  %402 = vmatpush.msra.mxu0 %v367
  %403 = vmatpush.msra.mxu0 %v366
  %404 = vmatpush.msra.mxu0 %v365
  %405 = vmatpush.msra.mxu0 %v364
  %406 = vmatpush.msra.mxu0 %v363
  %407 = vmatpush.msra.mxu0 %v362
  %408 = vmatpush.msra.mxu0 %v361
  %409 = vmatpush.msra.mxu0 %v360
  %410 = vmatpush.msra.mxu0 %v359
  %411 = vmatpush.msra.mxu0 %v358
  %412 = vmatpush.msra.mxu0 %v357
  %413 = vmatpush.msra.mxu0 %v356
  %414 = vmatpush.msra.mxu0 %v355
  %415 = vmatmul.f32.gmra.mxu0 %v371
  %v416 = vpop.f32.mrf.mxu0
  %v417 = vadd.f32 %v382, %v416
  %418 = vmatmul.f32.gmra.mxu0 %v372
  %v419 = vpop.f32.mrf.mxu0
  %v420 = vadd.f32 %v387, %v419
  %421 = vmatmul.f32.gmra.mxu0 %v373
  %v422 = vpop.f32.mrf.mxu0
  %v423 = vadd.f32 %v392, %v422
  %424 = vmatmul.f32.gmra.mxu0 %v374
  %v425 = vpop.f32.mrf.mxu0
  %v426 = vadd.f32 %v397, %v425
  %427 = vdwg.mxu0
  %v428 = vmax.f32 %v417, 0.0
  %v429 = vmax.f32 %v420, 0.0
  %v430 = vmax.f32 %v423, 0.0
  %v431 = vmax.f32 %v426, 0.0
  %v432 = vld [vmem:[%s6] sm:$0x1]
  %v433 = vld [vmem:[#allocation2] sm:$0x1]
  %435 = vset.pattern.permute.xlu0 0
  %436 = vperm.xlu0 %435, %v433
  %v437 = vpop.permute.xlu0 %436
  %v439 = vperm.slane %v437, 0
  %vm440 = vcmask 261120
  %v442 = vsel %vm440, %v432, 0
  %444 = vmatpush.msra.mxu0 0.0
  %445 = vmatpush.msra.mxu0 0.0
  %446 = vmatpush.msra.mxu0 0.0
  %447 = vmatpush.msra.mxu0 0.0
  %448 = vmatpush.msra.mxu0 0.0
  %449 = vmatpush.msra.mxu0 0.0
  %450 = vmatpush.msra.mxu0 0.0
  %451 = vmatpush.msra.mxu0 0.0
  %452 = vmatpush.msra.mxu0 0.0
  %453 = vmatpush.msra.mxu0 0.0
  %454 = vmatpush.msra.mxu0 0.0
  %455 = vmatpush.msra.mxu0 0.0
  %456 = vmatpush.msra.mxu0 %v431
  %457 = vmatpush.msra.mxu0 %v430
  %458 = vmatpush.msra.mxu0 %v429
  %459 = vmatpush.msra.mxu0 %v428
  %460 = vmatmul.f32.gmra.mxu0 %v442
  %v461 = vpop.f32.mrf.mxu0
  %v462 = vadd.f32 %v439, %v461
  %463 = vdwg.mxu0
  %464 = vst [vmem:[%s8] sm:$0x1] %v462
  // Predicated region
  $region34: #{qgnn_mixer_forward.1} parent=0 // pred_check
    _
  $region35: #{qgnn_mixer_forward.1} parent=0 // pred_check_branch
    %466 = sbr.rel (0) target = $region37
  $region36: #{qgnn_mixer_forward.1} parent=0 // pred_region
    _
  $region37: #{qgnn_mixer_forward.1} parent=0 // pred_fallthru
    _
  // Predicated region
  $region38: #{qgnn_mixer_forward.1} parent=0 // pred_check
    _
  $region39: #{qgnn_mixer_forward.1} parent=0 // pred_check_branch
    %468 = sbr.rel (0) target = $region41
  $region40: #{qgnn_mixer_forward.1} parent=0 // pred_region
    _
  $region41: #{qgnn_mixer_forward.1} parent=0 // pred_fallthru
    _

</llo_original>
